<compile_context>
chip_gen: v7x
topology: tpu7x:2x2x1
jax: 0.10.0
libtpu: 0.0.40
codegen_flags: <defaults>
</compile_context>

<pallas_src>
import functools

import jax
import jax.numpy as jnp
from jax import lax
from jax.experimental import pallas as pl
from jax.experimental.pallas import tpu as pltpu

_MiB = 1024 * 1024


def _round_up(n, m):
    return ((n + m - 1) // m) * m


def _vmem_capacity_bytes():
    """Physical VMEM of the local TPU generation; conservative fallback = 64 MiB (v7x)."""
    try:
        info = pltpu.get_tpu_info()
        cap = getattr(info, "vmem_capacity_bytes", None)
        if cap:
            return int(cap)
    except Exception:
        pass
    return 64 * _MiB


def _vmem_bytes_estimate(K, D, ts):
    """Peak-VMEM model with lane/sublane padding and double-buffered I/O."""
    Kp = _round_up(K, 8)
    Dp = _round_up(D, 8)
    Dl = _round_up(D, 128)
    cb = 2 * Kp * Dl * 4                 # -2*codebook (grid-invariant, still 2-buffered)
    e2 = 2 * Kp * 128 * 4                # (K,1) norms, lane-padded to 128
    x_io = 2 * Dp * ts * 4               # x tile, double-buffered
    zq_io = 2 * Dp * ts * 4              # zq tile, double-buffered
    idx_io = 2 * 8 * ts * 4              # (1,1,1,ts) index tile
    sse_io = 2 * 8 * 128 * 4             # (1,1,1,1) SSE partial
    tmp = 4 * Kp * ts * 4 + 2 * Dp * ts * 4   # distT / iota / one-hot / zqT temporaries
    return cb + e2 + x_io + zq_io + idx_io + sse_io + tmp


def _pick_spatial_tiling(S, K, D, max_tile, budget):
    """Return (tile, padded_S). Prefers the largest 128-multiple tile that divides S
    and fits `budget`; otherwise pads S up to a multiple of the largest fitting tile."""
    S128 = _round_up(S, 128)
    lim = min(max(128, max_tile), S128)
    best_div, best_any = None, None
    cand = 128
    while cand <= lim:
        if _vmem_bytes_estimate(K, D, cand) <= budget:
            best_any = cand
            if S % cand == 0:
                best_div = cand
        cand += 128
    if best_div is not None:
        return best_div, S
    if best_any is None:
        # Even a 128-lane tile exceeds the budget (very large codebook).
        # TODO(synk): add a codebook-chunk (K) loop with a running (dmin, argmin)
        # carry so huge codebooks keep large spatial tiles.
        best_any = 128
    return best_any, _round_up(S, best_any)


def _vq_kernel(x_ref, e_ref, e2_ref, zq_ref, idx_ref, sse_ref, *,
               s_total, tile_s, needs_mask, dist_bf16):
    # x_ref : (1, D, TS)  input tile, channels on sublanes, spatial on lanes
    # e_ref : (K, D)      pre-scaled codebook (-2 * e), resident across grid steps
    # e2_ref: (K, 1)      precomputed squared codebook norms ||e_k||^2
    x = x_ref[0].astype(jnp.float32)                     # (D, TS)
    e_s = e_ref[...].astype(jnp.float32)                 # (K, D) == -2*e
    e2 = e2_ref[...]                                     # (K, 1)

    if dist_bf16:
        lhs, rhs = e_s.astype(jnp.bfloat16), x.astype(jnp.bfloat16)
    else:
        lhs, rhs = e_s, x

    # distT[k, m] = ||e_k||^2 - 2 <e_k, x_m>   (||x_m||^2 dropped: constant per column,
    # does not change the argmin). MXU matmul, contraction over D.
    distT = lax.dot_general(lhs, rhs,
                            dimension_numbers=(((1,), (0,)), ((), ())),
                            preferred_element_type=jnp.float32) + e2   # (K, TS)

    # First-occurrence argmin along the codebook (sublane) axis, built from
    # min-reductions (robust lowering; ties resolved to the smallest index).
    k_count = distT.shape[0]
    k_iota = lax.broadcasted_iota(jnp.int32, distT.shape, 0)           # (K, TS)
    dmin = jnp.min(distT, axis=0, keepdims=True)                       # (1, TS)
    idx = jnp.min(jnp.where(distT == dmin, k_iota, k_count),
                  axis=0, keepdims=True).astype(jnp.int32)             # (1, TS)
    idx_ref[...] = idx[None, None]                                     # (1, 1, 1, TS)

    # Per-tile partial sum of squared error for the commitment loss:
    # ||e_idx - x||^2 = dmin + ||x||^2 per column (no dependency on the gather matmul).
    x2 = jnp.sum(x * x, axis=0, keepdims=True)                         # (1, TS)
    r = dmin + x2
    if needs_mask:
        col = (pl.program_id(1) * tile_s
               + lax.broadcasted_iota(jnp.int32, r.shape, 1))
        r = jnp.where(col < s_total, r, 0.0)
    sse_ref[...] = jnp.sum(r, keepdims=True)[None, None]               # (1, 1, 1, 1)

    # Gather e[idx] via a one-hot matmul (MXU). e_s = -2*e, so scale by -0.5
    # (power of two => exact); result is (D, TS) -> lane-dense store.
    onehot = (k_iota == idx).astype(jnp.float32)                       # (K, TS)
    zqT = lax.dot_general(e_s, onehot,
                          dimension_numbers=(((0,), (0,)), ((), ())),
                          preferred_element_type=jnp.float32) * (-0.5)  # (D, TS)
    zq_ref[0] = zqT.astype(zq_ref.dtype)


@functools.partial(jax.jit,
                   static_argnames=("commitment_weight", "tile_s", "dist_bf16"))
def vector_quantizer_v2_forward(z, codebook, commitment_weight=0.25,
                                tile_s=4096, dist_bf16=False):
    """Forward pass of VectorQuantizer_v2.

    z:        (b, c, f, h, w) float32 (NCFHW, same as the PyTorch module)
    codebook: (codebook_size, emb_dim) float32, emb_dim == c
    """
    b, c, f, h, w = z.shape
    K, D = codebook.shape
    assert D == c, "codebook emb_dim must equal channel dim"

    S = f * h * w
    M = b * S

    # Free reshape (no HBM transpose): channels stay on the second axis.
    x = z.reshape(b, c, S)
    cb32 = codebook.astype(jnp.float32)
    e_scaled = -2.0 * cb32                                   # fold the -2 into the operand
    e2 = jnp.sum(cb32 * cb32, axis=-1, keepdims=True)        # (K, 1)

    # Generation-aware tile selection (v5e/v6e 128 MiB VMEM, v7x 64 MiB).
    vmem_cap = _vmem_capacity_bytes()
    budget = int(0.65 * vmem_cap)
    ts, S_pad = _pick_spatial_tiling(S, K, D, tile_s, budget)
    needs_mask = S_pad != S
    if needs_mask:
        x = jnp.pad(x, ((0, 0), (0, 0), (0, S_pad - S)))
    n_s = S_pad // ts

    est = _vmem_bytes_estimate(K, D, ts)
    vmem_limit = max(32 * _MiB, min(int(0.9 * vmem_cap), int(1.3 * est)))

    kernel = functools.partial(_vq_kernel, s_total=S, tile_s=ts,
                               needs_mask=needs_mask, dist_bf16=dist_bf16)

    zq_flat, idx4, sse = pl.pallas_call(
        kernel,
        out_shape=(
            jax.ShapeDtypeStruct((b, D, S_pad), z.dtype),              # zq (channels-major)
            jax.ShapeDtypeStruct((b, n_s, 1, ts), jnp.int32),          # indices (lane-dense)
            jax.ShapeDtypeStruct((b, n_s, 1, 1), jnp.float32),         # per-tile SSE partials
        ),
        grid_spec=pltpu.PrefetchScalarGridSpec(
            num_scalar_prefetch=0,
            grid=(b, n_s),
            in_specs=[
                pl.BlockSpec((1, D, ts), lambda bi, si: (bi, 0, si)),  # x tile
                pl.BlockSpec((K, D), lambda bi, si: (0, 0)),           # -2*codebook (resident)
                pl.BlockSpec((K, 1), lambda bi, si: (0, 0)),           # codebook norms
            ],
            out_specs=[
                pl.BlockSpec((1, D, ts), lambda bi, si: (bi, 0, si)),
                pl.BlockSpec((1, 1, 1, ts), lambda bi, si: (bi, si, 0, 0)),
                pl.BlockSpec((1, 1, 1, 1), lambda bi, si: (bi, si, 0, 0)),
            ],
        ),
        compiler_params=pltpu.CompilerParams(
            # Both axes parallel: no cross-tile state, so v7x can shard (b, n_s)
            # across its 2 TensorCores.
            dimension_semantics=("parallel", "parallel"),
            vmem_limit_bytes=vmem_limit,
        ),
    )(x, e_scaled, e2)

    commit_loss = (jnp.sum(sse) / jnp.float32(M * D)) * commitment_weight
    if needs_mask:
        zq_flat = zq_flat[:, :, :S]
    zq = zq_flat.reshape(b, c, f, h, w)                                # free reshape
    idx_flat = idx4.reshape(b, S_pad)
    if needs_mask:
        idx_flat = idx_flat[:, :S]
    indices = idx_flat.reshape(M, 1)                                   # row order = b,(f h w)
    return zq, commit_loss, {"min_encoding_indices": indices}
    # TODO(synk): EMA codebook update (decay) and get_codebook_feat are training/
    # utility paths of the module and are not part of this forward kernel.


if __name__ == "__main__":
    # Small, module-consistent shapes: batch=2, emb_dim=32 channels, 2 frames, 8x8 spatial.
    codebook_size, emb_dim = 128, 32
    b, f, h, w = 2, 2, 8, 8
    cw = 0.25

    key = jax.random.PRNGKey(0)
    k_z, k_e = jax.random.split(key)
    z = jax.random.normal(k_z, (b, emb_dim, f, h, w), dtype=jnp.float32)
    codebook = jax.random.normal(k_e, (codebook_size, emb_dim), dtype=jnp.float32)

    zq, commit_loss, aux = vector_quantizer_v2_forward(z, codebook, commitment_weight=cw)
    idx = aux["min_encoding_indices"]
    jax.block_until_ready((zq, commit_loss, idx))

    # ---- verification against a pure-JAX reference ----
    x = jnp.transpose(z, (0, 2, 3, 4, 1)).reshape(-1, emb_dim)   # (M, D), module row order
    e2 = jnp.sum(codebook * codebook, axis=-1)
    # argmin_k ||x - e_k||^2 == argmin_k (||e_k||^2 - 2 x.e_k): ||x||^2 is per-row constant.
    dist = e2[None, :] - 2.0 * (x @ codebook.T)
    idx_ref = jnp.argmin(dist, axis=-1).astype(jnp.int32)[:, None]

    M = x.shape[0]
    assert zq.shape == z.shape
    assert idx.shape == (M, 1) and idx.dtype == jnp.int32

    # Kernel indices must pick (near-)optimal codebook entries (tie-tolerant check
    # against MXU-vs-XLA matmul rounding) and agree with the reference argmin.
    d_pick = jnp.take_along_axis(dist, idx, axis=1)[:, 0]
    d_best = jnp.min(dist, axis=-1)
    assert bool(jnp.all(d_pick - d_best <= 1e-3))
    assert float(jnp.mean((idx == idx_ref).astype(jnp.float32))) >= 0.99

    # zq must be the selected codebook rows (checks one-hot gather + -0.5 rescale + layout).
    zq_expect = jnp.transpose(codebook[idx[:, 0]].reshape(b, f, h, w, emb_dim),
                              (0, 4, 1, 2, 3))
    assert bool(jnp.allclose(zq, zq_expect, atol=1e-4, rtol=1e-4))

    # Commitment loss consistent with the selected entries (SSE derived from dmin + ||x||^2).
    loss_expect = jnp.mean((codebook[idx[:, 0]] - x) ** 2) * cw
    assert bool(jnp.allclose(commit_loss, loss_expect, atol=1e-4, rtol=1e-4))

    print("KERNEL_OK")
</pallas_src>

<mosaic_0001>
module attributes {stable_mosaic.version = 11 : i64} {
  func.func @_vq_kernel(%arg0: i32, %arg1: i32, %arg2: memref<1x32x128xf32, #tpu.memory_space<vmem>>, %arg3: memref<128x32xf32, #tpu.memory_space<vmem>>, %arg4: memref<128x1xf32, #tpu.memory_space<vmem>>, %arg5: memref<1x32x128xf32, #tpu.memory_space<vmem>>, %arg6: memref<1x1x1x128xi32, #tpu.memory_space<vmem>>, %arg7: memref<1x1x1x1xf32, #tpu.memory_space<vmem>>) attributes {dimension_semantics = [#tpu.dimension_semantics<parallel>, #tpu.dimension_semantics<parallel>], iteration_bounds = array<i64: 2, 1>, scalar_prefetch = 0 : i64, scratch_operands = 0 : i64, tpu.core_type = #tpu.core_type<tc>, window_params = [{transform_indices = @transform_0, window_bounds = array<i64: 1, 32, 128>}, {pipeline_mode = #tpu.pipeline_mode<synchronous>, transform_indices = @transform_1, window_bounds = array<i64: 128, 32>}, {pipeline_mode = #tpu.pipeline_mode<synchronous>, transform_indices = @transform_2, window_bounds = array<i64: 128, 1>}, {transform_indices = @transform_3, window_bounds = array<i64: 1, 32, 128>}, {transform_indices = @transform_4, window_bounds = array<i64: 1, 1, 1, 128>}, {transform_indices = @transform_5, window_bounds = array<i64: 1, 1, 1, 1>}]} {
    %c0 = arith.constant 0 : index
    %c0_0 = arith.constant 0 : index
    %c0_1 = arith.constant 0 : index
    %0 = vector.load %arg2[%c0, %c0_0, %c0_1] : memref<1x32x128xf32, #tpu.memory_space<vmem>>, vector<1x32x128xf32>
    %1 = vector.shape_cast %0 : vector<1x32x128xf32> to vector<32x128xf32>
    %c0_2 = arith.constant 0 : index
    %c0_3 = arith.constant 0 : index
    %2 = vector.load %arg3[%c0_2, %c0_3] : memref<128x32xf32, #tpu.memory_space<vmem>>, vector<128x32xf32>
    %c0_4 = arith.constant 0 : index
    %c0_5 = arith.constant 0 : index
    %3 = vector.load %arg4[%c0_4, %c0_5] : memref<128x1xf32, #tpu.memory_space<vmem>>, vector<128x1xf32>
    %cst = arith.constant dense<0.000000e+00> : vector<128x128xf32>
    %4 = tpu.matmul %2, %1, %cst {dimension_numbers = #tpu.dot_dimension_numbers<[1], [0], [0], [1], [0, 0, 1, 1], [], []>} : vector<128x32xf32>, vector<32x128xf32>, vector<128x128xf32> -> vector<128x128xf32>
    %5 = vector.broadcast %3 : vector<128x1xf32> to vector<128x128xf32>
    %6 = arith.addf %4, %5 : vector<128x128xf32>
    %7 = tpu.iota {dimensions = array<i32: 0>} : vector<128x128xi32>
    %cst_6 = arith.constant dense<0x7F800000> : vector<128xf32>
    %8 = vector.multi_reduction <minimumf>, %6, %cst_6 [0] : vector<128x128xf32> to vector<128xf32>
    %9 = vector.shape_cast %8 : vector<128xf32> to vector<1x128xf32>
    %10 = vector.broadcast %9 : vector<1x128xf32> to vector<128x128xf32>
    %11 = arith.cmpf oeq, %6, %10 : vector<128x128xf32>
    %c128_i32 = arith.constant 128 : i32
    %12 = vector.broadcast %c128_i32 : i32 to vector<128x128xi32>
    %13 = arith.select %11, %7, %12 : vector<128x128xi1>, vector<128x128xi32>
    %cst_7 = arith.constant dense<2147483647> : vector<128xi32>
    %14 = vector.multi_reduction <minsi>, %13, %cst_7 [0] : vector<128x128xi32> to vector<128xi32>
    %15 = vector.shape_cast %14 : vector<128xi32> to vector<1x128xi32>
    %16 = vector.shape_cast %15 : vector<1x128xi32> to vector<1x1x1x128xi32>
    %c0_8 = arith.constant 0 : index
    %c0_9 = arith.constant 0 : index
    %c0_10 = arith.constant 0 : index
    %c0_11 = arith.constant 0 : index
    %17 = vector.load %arg6[%c0_8, %c0_9, %c0_10, %c0_11] : memref<1x1x1x128xi32, #tpu.memory_space<vmem>>, vector<1x1x1x128xi32>
    tpu.vector_store %arg6[%c0_8, %c0_9, %c0_10, %c0_11], %16 {strides = array<i32>} : memref<1x1x1x128xi32, #tpu.memory_space<vmem>>, vector<1x1x1x128xi32>,
    %18 = arith.mulf %1, %1 : vector<32x128xf32>
    %cst_12 = arith.constant dense<0.000000e+00> : vector<128xf32>
    %19 = vector.multi_reduction <add>, %18, %cst_12 [0] : vector<32x128xf32> to vector<128xf32>
    %20 = vector.shape_cast %19 : vector<128xf32> to vector<1x128xf32>
    %21 = arith.addf %9, %20 : vector<1x128xf32>
    %22 = vector.shape_cast %21 : vector<1x128xf32> to vector<1x1x128xf32>
    %cst_13 = arith.constant dense<0.000000e+00> : vector<1xf32>
    %23 = vector.multi_reduction <add>, %22, %cst_13 [1, 2] : vector<1x1x128xf32> to vector<1xf32>
    %24 = vector.shape_cast %23 : vector<1xf32> to vector<1x1x1xf32>
    %25 = vector.extract %24[0, 0, 0] : f32 from vector<1x1x1xf32>
    %26 = vector.broadcast %25 : f32 to vector<1x1xf32>
    %27 = vector.shape_cast %26 : vector<1x1xf32> to vector<1x1x1x1xf32>
    %c0_14 = arith.constant 0 : index
    %c0_15 = arith.constant 0 : index
    %c0_16 = arith.constant 0 : index
    %c0_17 = arith.constant 0 : index
    %28 = vector.load %arg7[%c0_14, %c0_15, %c0_16, %c0_17] : memref<1x1x1x1xf32, #tpu.memory_space<vmem>>, vector<1x1x1x1xf32>
    tpu.vector_store %arg7[%c0_14, %c0_15, %c0_16, %c0_17], %27 {strides = array<i32>} : memref<1x1x1x1xf32, #tpu.memory_space<vmem>>, vector<1x1x1x1xf32>,
    %29 = vector.broadcast %15 : vector<1x128xi32> to vector<128x128xi32>
    %30 = arith.cmpi eq, %7, %29 : vector<128x128xi32>
    %31 = arith.extui %30 : vector<128x128xi1> to vector<128x128xi32>
    %32 = arith.sitofp %31 : vector<128x128xi32> to vector<128x128xf32>
    %cst_18 = arith.constant dense<0.000000e+00> : vector<32x128xf32>
    %33 = tpu.matmul %2, %32, %cst_18 {dimension_numbers = #tpu.dot_dimension_numbers<[0], [0], [1], [1], [0, 1, 1, 1], [], []>} : vector<128x32xf32>, vector<128x128xf32>, vector<32x128xf32> -> vector<32x128xf32>
    %cst_19 = arith.constant -5.000000e-01 : f32
    %34 = vector.broadcast %cst_19 : f32 to vector<32x128xf32>
    %35 = arith.mulf %33, %34 : vector<32x128xf32>
    %c0_20 = arith.constant 0 : index
    %c0_21 = arith.constant 0 : index
    %c0_22 = arith.constant 0 : index
    %36 = vector.load %arg5[%c0_20, %c0_21, %c0_22] : memref<1x32x128xf32, #tpu.memory_space<vmem>>, vector<1x32x128xf32>
    %37 = vector.shape_cast %36 : vector<1x32x128xf32> to vector<32x128xf32>
    %38 = vector.shape_cast %35 : vector<32x128xf32> to vector<1x32x128xf32>
    tpu.vector_store %arg5[%c0_20, %c0_21, %c0_22], %38 {strides = array<i32>} : memref<1x32x128xf32, #tpu.memory_space<vmem>>, vector<1x32x128xf32>,
    return
  }
  func.func @transform_0(%arg0: i32, %arg1: i32) -> (i32, i32, i32) {
    %c0_i32 = arith.constant 0 : i32
    %c0_i32_0 = arith.constant 0 : i32
    return %arg0, %c0_i32, %arg1 : i32, i32, i32
  }
  func.func @transform_1(%arg0: i32, %arg1: i32) -> (i32, i32) {
    %c0_i32 = arith.constant 0 : i32
    %c0_i32_0 = arith.constant 0 : i32
    %c0_i32_1 = arith.constant 0 : i32
    return %c0_i32, %c0_i32_0 : i32, i32
  }
  func.func @transform_2(%arg0: i32, %arg1: i32) -> (i32, i32) {
    %c0_i32 = arith.constant 0 : i32
    %c0_i32_0 = arith.constant 0 : i32
    %c0_i32_1 = arith.constant 0 : i32
    return %c0_i32, %c0_i32_0 : i32, i32
  }
  func.func @transform_3(%arg0: i32, %arg1: i32) -> (i32, i32, i32) {
    %c0_i32 = arith.constant 0 : i32
    %c0_i32_0 = arith.constant 0 : i32
    return %arg0, %c0_i32, %arg1 : i32, i32, i32
  }
  func.func @transform_4(%arg0: i32, %arg1: i32) -> (i32, i32, i32, i32) {
    %c0_i32 = arith.constant 0 : i32
    %c0_i32_0 = arith.constant 0 : i32
    %c0_i32_1 = arith.constant 0 : i32
    return %arg0, %arg1, %c0_i32, %c0_i32_0 : i32, i32, i32, i32
  }
  func.func @transform_5(%arg0: i32, %arg1: i32) -> (i32, i32, i32, i32) {
    %c0_i32 = arith.constant 0 : i32
    %c0_i32_0 = arith.constant 0 : i32
    %c0_i32_1 = arith.constant 0 : i32
    return %arg0, %arg1, %c0_i32, %c0_i32_0 : i32, i32, i32, i32
  }
}

</mosaic_0001>

<llo_original>
// kernel: vector_quantizer_v2_forward.1
$region0: #{vector_quantizer_v2_forward.1}
  #allocation0 [shape = 'u32[]', space=smem, size = 0x4, offset = 0x4, fixed_abs, tag = 'smem constant byte address 0x4 - core index']
  #allocation1 [shape = 'u32[144,128]{1,0:T(1,128)}', space=vmem, size = 0x12000, scoped, tag = 'internal scratch']
  %s0 = inlined_call_operand.vmem [shape: f32[2,32,128], index: 0, kind: input, shape index: {}]
  %s1 = inlined_call_operand.vmem [shape: f32[128,32], index: 1, kind: input, shape index: {}]
  %s2 = inlined_call_operand.vmem [shape: f32[128,1], index: 2, kind: input, shape index: {}]
  %s3 = inlined_call_operand.vmem [shape: f32[2,32,128], index: 3, kind: output, shape index: {0}]
  %s4 = inlined_call_operand.hbm [shape: s32[2,1,1,128], index: 4, kind: output, shape index: {1}]
  %s5 = inlined_call_operand.vmem [shape: f32[2,1,1,1], index: 5, kind: output, shape index: {2}]
  %6 = xla_tuple %s3, %s4, %s5
  %s7 = sld [smem:[#allocation0]]
  $region61: #{vector_quantizer_v2_forward.1} parent=0
    _
  %s9 = ssub.s32 1, %s7
  %s10 = scalar_select 0, %s9, %s7
  $region1: #{vector_quantizer_v2_forward.1} parent=0
    #allocation2 [shape = 'u8[1024]{0}', space=vmem, size = 0x400, scoped, tag = 'output window, operand 1']
    #allocation3 [shape = 's32[2]{0}', space=sflag, size = 0x8, scoped, tag = 'scoped memory for vector_quantizer_v2_forward.1']
    %11 = vsyncpa [#allocation3], 0
    %s12 = scalar_lea.sflag [#allocation3], 1
    %13 = vsyncpa %s12, 0
    loop: start=0, step=1, limit=4
    $region2: #{vector_quantizer_v2_forward.1} parent=1 // loop_pre_header
      _
    $region3: #{vector_quantizer_v2_forward.1} parent=1 // loop_header
      %s15 = sphi 0, %s19
      %p16 = scmp.ge.s32.totalorder %s15, 4
      %s22 = sphi 0, %s34
      %s23 = sphi 0, %s30
      %s24 = sphi 0, %s22
      %s25 = sphi 0, %s23
      %s26 = sphi 0, %s24
      %s27 = sphi 0, %s25
      %s39 = sphi 0, %s41
      %s42 = sphi 0, %s39
      %s43 = sphi 0, %s42
      %s59 = sphi 0, %s43
      %s63 = sphi 0, %s63
      %s65 = sphi 0, %s63
      %s66 = sphi 0, %s65
      %s80 = sphi 0, %s66
      %s84 = sphi 0, %s84
      %s86 = sphi 0, %s84
      %s87 = sphi 0, %s86
      %s101 = sphi 0, %s87
      %s109 = sphi 0, %s111
      %s112 = sphi 0, %s109
      %s113 = sphi 0, %s112
      %s129 = sphi 0, %s113
      %s137 = sphi 0, %s139
      %s140 = sphi 0, %s137
      %s141 = sphi 0, %s140
      %s157 = sphi 0, %s141
      %s165 = sphi 0, %s167
      %s168 = sphi 0, %s165
      %s169 = sphi 0, %s168
      %s185 = sphi 0, %s169
    $region4: #{vector_quantizer_v2_forward.1} parent=1 // loop_header_branch
      %18 = sbr.rel (%p16) target = $region8
    $region5: #{vector_quantizer_v2_forward.1} parent=1 // loop_body
      %s20 = ssub.s32 %s15, 1
      %s21 = ssub.s32 %s15, 2
      %s28 = sadd.s32 1, %s23
      %p29 = scmp.ge.s32.totalorder %s28, 1
      %s30 = scalar_select %p29, 0, %s28
      %s31 = sadd.s32 1, %s22
      %s32 = scalar_select %p29, %s31, %s22
      %p33 = scmp.ge.s32.totalorder %s32, 2
      %s34 = scalar_select %p33, 0, %s32
      %s35 = ssub.s32 %s22, %s34
      %s36 = ssub.s32 %s23, %s30
      %s37 = sor.u32 %s35, %s36
      %p38 = scmp.eq.s32.totalorder %s37, 0
      %s40 = sadd.s32 %s39, 1
      %s41 = scalar_select %p38, %s39, %s40
      %p44 = pneg %p38
      %p45 = scmp.eq.s32.totalorder %s15, 1
      %p46 = por %p44, %p45
      %p47 = scmp.ne.s32.totalorder %s39, %s42
      %p48 = scmp.eq.s32.totalorder %s15, 0
      %p49 = por %p47, %p48
      %p50 = scmp.ne.s32.totalorder %s39, %s42
      %p51 = scmp.eq.s32.totalorder %s20, 1
      %p52 = por %p50, %p51
      %p53 = scmp.ne.s32.totalorder %s42, %s43
      %p54 = scmp.eq.s32.totalorder %s20, 0
      %p55 = por %p53, %p54
      %p56 = scmp.ne.s32.totalorder %s42, %s43
      %p57 = scmp.eq.s32.totalorder %s21, 1
      %p58 = por %p56, %p57
      %p60 = scmp.ne.s32.totalorder %s43, %s59
      %p61 = scmp.eq.s32.totalorder %s21, 0
      %p62 = por %p60, %p61
      %s64 = sadd.s32 %s63, 1
      %p67 = scmp.eq.s32.totalorder %s15, 1
      %p68 = scmp.ne.s32.totalorder %s63, %s65
      %p69 = scmp.eq.s32.totalorder %s15, 0
      %p70 = por %p68, %p69
      %p71 = scmp.ne.s32.totalorder %s63, %s65
      %p72 = scmp.eq.s32.totalorder %s20, 1
      %p73 = por %p71, %p72
      %p74 = scmp.ne.s32.totalorder %s65, %s66
      %p75 = scmp.eq.s32.totalorder %s20, 0
      %p76 = por %p74, %p75
      %p77 = scmp.ne.s32.totalorder %s65, %s66
      %p78 = scmp.eq.s32.totalorder %s21, 1
      %p79 = por %p77, %p78
      %p81 = scmp.ne.s32.totalorder %s66, %s80
      %p82 = scmp.eq.s32.totalorder %s21, 0
      %p83 = por %p81, %p82
      %s85 = sadd.s32 %s84, 1
      %p88 = scmp.eq.s32.totalorder %s15, 1
      %p89 = scmp.ne.s32.totalorder %s84, %s86
      %p90 = scmp.eq.s32.totalorder %s15, 0
      %p91 = por %p89, %p90
      %p92 = scmp.ne.s32.totalorder %s84, %s86
      %p93 = scmp.eq.s32.totalorder %s20, 1
      %p94 = por %p92, %p93
      %p95 = scmp.ne.s32.totalorder %s86, %s87
      %p96 = scmp.eq.s32.totalorder %s20, 0
      %p97 = por %p95, %p96
      %p98 = scmp.ne.s32.totalorder %s86, %s87
      %p99 = scmp.eq.s32.totalorder %s21, 1
      %p100 = por %p98, %p99
      %p102 = scmp.ne.s32.totalorder %s87, %s101
      %p103 = scmp.eq.s32.totalorder %s21, 0
      %p104 = por %p102, %p103
      %s105 = ssub.s32 %s22, %s34
      %s106 = ssub.s32 %s23, %s30
      %s107 = sor.u32 %s105, %s106
      %p108 = scmp.eq.s32.totalorder %s107, 0
      %s110 = sadd.s32 %s109, 1
      %s111 = scalar_select %p108, %s109, %s110
      %p114 = pneg %p108
      %p115 = scmp.eq.s32.totalorder %s15, 1
      %p116 = por %p114, %p115
      %p117 = scmp.ne.s32.totalorder %s109, %s112
      %p118 = scmp.eq.s32.totalorder %s15, 0
      %p119 = por %p117, %p118
      %p120 = scmp.ne.s32.totalorder %s109, %s112
      %p121 = scmp.eq.s32.totalorder %s20, 1
      %p122 = por %p120, %p121
      %p123 = scmp.ne.s32.totalorder %s112, %s113
      %p124 = scmp.eq.s32.totalorder %s20, 0
      %p125 = por %p123, %p124
      %p126 = scmp.ne.s32.totalorder %s112, %s113
      %p127 = scmp.eq.s32.totalorder %s21, 1
      %p128 = por %p126, %p127
      %p130 = scmp.ne.s32.totalorder %s113, %s129
      %p131 = scmp.eq.s32.totalorder %s21, 0
      %p132 = por %p130, %p131
      %s133 = ssub.s32 %s22, %s34
      %s134 = ssub.s32 %s23, %s30
      %s135 = sor.u32 %s133, %s134
      %p136 = scmp.eq.s32.totalorder %s135, 0
      %s138 = sadd.s32 %s137, 1
      %s139 = scalar_select %p136, %s137, %s138
      %p142 = pneg %p136
      %p143 = scmp.eq.s32.totalorder %s15, 1
      %p144 = por %p142, %p143
      %p145 = scmp.ne.s32.totalorder %s137, %s140
      %p146 = scmp.eq.s32.totalorder %s15, 0
      %p147 = por %p145, %p146
      %p148 = scmp.ne.s32.totalorder %s137, %s140
      %p149 = scmp.eq.s32.totalorder %s20, 1
      %p150 = por %p148, %p149
      %p151 = scmp.ne.s32.totalorder %s140, %s141
      %p152 = scmp.eq.s32.totalorder %s20, 0
      %p153 = por %p151, %p152
      %p154 = scmp.ne.s32.totalorder %s140, %s141
      %p155 = scmp.eq.s32.totalorder %s21, 1
      %p156 = por %p154, %p155
      %p158 = scmp.ne.s32.totalorder %s141, %s157
      %p159 = scmp.eq.s32.totalorder %s21, 0
      %p160 = por %p158, %p159
      %s161 = ssub.s32 %s22, %s34
      %s162 = ssub.s32 %s23, %s30
      %s163 = sor.u32 %s161, %s162
      %p164 = scmp.eq.s32.totalorder %s163, 0
      %s166 = sadd.s32 %s165, 1
      %s167 = scalar_select %p164, %s165, %s166
      %p170 = pneg %p164
      %p171 = scmp.eq.s32.totalorder %s15, 1
      %p172 = por %p170, %p171
      %p173 = scmp.ne.s32.totalorder %s165, %s168
      %p174 = scmp.eq.s32.totalorder %s15, 0
      %p175 = por %p173, %p174
      %p176 = scmp.ne.s32.totalorder %s165, %s168
      %p177 = scmp.eq.s32.totalorder %s20, 1
      %p178 = por %p176, %p177
      %p179 = scmp.ne.s32.totalorder %s168, %s169
      %p180 = scmp.eq.s32.totalorder %s20, 0
      %p181 = por %p179, %p180
      %p182 = scmp.ne.s32.totalorder %s168, %s169
      %p183 = scmp.eq.s32.totalorder %s21, 1
      %p184 = por %p182, %p183
      %p186 = scmp.ne.s32.totalorder %s169, %s185
      %p187 = scmp.eq.s32.totalorder %s21, 0
      %p188 = por %p186, %p187
      %p189 = scmp.le.s32.totalorder 1, %s15
      %p190 = scmp.lt.s32.totalorder %s15, 3
      %p191 = pnand %p189, %p190
      %p192 = pneg %p191
      // Predicated region
      $region9: #{vector_quantizer_v2_forward.1} parent=5 // pred_check
        _
      $region10: #{vector_quantizer_v2_forward.1} parent=5 // pred_check_branch
        %194 = sbr.rel (%p191) target = $region12
      $region11: #{vector_quantizer_v2_forward.1} parent=5 // pred_region
        %s195 = ssub.s32 %s15, 1
        // Predicated region
        $region13: #{vector_quantizer_v2_forward.1} parent=11 // pred_check
          %p196 = pneg %p76
        $region14: #{vector_quantizer_v2_forward.1} parent=11 // pred_check_branch
          %198 = sbr.rel (%p196) target = $region16
        $region15: #{vector_quantizer_v2_forward.1} parent=11 // pred_region
          _
        $region16: #{vector_quantizer_v2_forward.1} parent=11 // pred_fallthru
          _
        // Predicated region
        $region17: #{vector_quantizer_v2_forward.1} parent=11 // pred_check
          %p199 = pneg %p97
        $region18: #{vector_quantizer_v2_forward.1} parent=11 // pred_check_branch
          %201 = sbr.rel (%p199) target = $region20
        $region19: #{vector_quantizer_v2_forward.1} parent=11 // pred_region
          _
        $region20: #{vector_quantizer_v2_forward.1} parent=11 // pred_fallthru
          _
      $region12: #{vector_quantizer_v2_forward.1} parent=5 // pred_fallthru
        _
      %p202 = scmp.lt.s32.totalorder %s15, 2
      // Predicated region
      $region21: #{vector_quantizer_v2_forward.1} parent=5 // pred_check
        %p203 = pneg %p202
      $region22: #{vector_quantizer_v2_forward.1} parent=5 // pred_check_branch
        %205 = sbr.rel (%p203) target = $region24
      $region23: #{vector_quantizer_v2_forward.1} parent=5 // pred_region
        // Predicated region
        $region25: #{vector_quantizer_v2_forward.1} parent=23 // pred_check
          %p206 = pneg %p49
        $region26: #{vector_quantizer_v2_forward.1} parent=23 // pred_check_branch
          %208 = sbr.rel (%p206) target = $region28
        $region27: #{vector_quantizer_v2_forward.1} parent=23 // pred_region
          %p209 = scmp.lt.s32.totalorder %s22, 1
          %s210 = scalar_select %p209, %s22, 1
          %p211 = scmp.lt.s32.totalorder %s23, 0
          %s212 = scalar_select %p211, %s23, 0
          %s213 = smul.addr %s210, 4
          %s214 = sadd.s32 %s212, %s213
          %s215 = smul.addr %s214, 8
          %s216 = scalar_lea.vmem %s0, %s215
        $region28: #{vector_quantizer_v2_forward.1} parent=23 // pred_fallthru
          _
      $region24: #{vector_quantizer_v2_forward.1} parent=5 // pred_fallthru
        _
      %p217 = scmp.le.s32.totalorder 1, %s15
      %p218 = scmp.lt.s32.totalorder %s15, 3
      %p219 = pnand %p217, %p218
      %p220 = pneg %p219
      // Predicated region
      $region29: #{vector_quantizer_v2_forward.1} parent=5 // pred_check
        _
      $region30: #{vector_quantizer_v2_forward.1} parent=5 // pred_check_branch
        %222 = sbr.rel (%p219) target = $region32
      $region31: #{vector_quantizer_v2_forward.1} parent=5 // pred_region
        %s223 = ssub.s32 %s15, 1
        %p224 = scmp.lt.s32.totalorder %s24, 1
        %s225 = scalar_select %p224, %s24, 1
        %p226 = scmp.lt.s32.totalorder %s25, 0
        %s227 = scalar_select %p226, %s25, 0
        %s228 = smul.addr %s225, 4
        %s229 = sadd.s32 %s227, %s228
        %s230 = smul.addr %s229, 8
        %s231 = scalar_lea.vmem %s0, %s230
        %p232 = pneg %p55
        %p233 = pneg %p52
        %p234 = pneg %p76
        %p235 = pneg %p73
        %p236 = pneg %p97
        %p237 = pneg %p94
        %p238 = pneg %p125
        %p239 = pneg %p122
        %p240 = scmp.lt.s32.totalorder %s24, 1
        %s241 = scalar_select %p240, %s24, 1
        %p242 = scmp.lt.s32.totalorder %s25, 0
        %s243 = scalar_select %p242, %s25, 0
        %s244 = smul.addr %s241, 4
        %s245 = sadd.s32 %s243, %s244
        %s246 = smul.addr %s245, 8
        %s247 = scalar_lea.vmem %s3, %s246
        %p248 = pneg %p153
        %p249 = pneg %p150
        %s250 = sand.u32 %s140, 1
        %s251 = scalar_lea.sflag [#allocation3], %s250
        %s252 = sand.u32 %s140, 1
        %s253 = scalar_lea.vmem [#allocation2], %s252
        %p254 = pneg %p181
        %p255 = pneg %p178
        %p256 = scmp.lt.s32.totalorder %s24, 1
        %s257 = scalar_select %p256, %s24, 1
        %p258 = scmp.lt.s32.totalorder %s25, 0
        %s259 = scalar_select %p258, %s25, 0
        %s260 = sadd.s32 %s259, %s257
        %s261 = scalar_lea.vmem %s5, %s260
        %p262 = scmp.lt.s32.totalorder %s24, 1
        %s263 = scalar_select %p262, %s24, 1
        %p264 = scmp.lt.s32.totalorder %s25, 0
        %s265 = scalar_select %p264, %s25, 0
        %s266 = smul.addr %s263, 4
        %s267 = sadd.s32 %s265, %s266
        %s268 = smul.addr %s267, 8
        %s269 = scalar_lea.vmem %s0, %s268
        %p270 = scmp.lt.s32.totalorder %s24, 1
        %s271 = scalar_select %p270, %s24, 1
        %p272 = scmp.lt.s32.totalorder %s25, 0
        %s273 = scalar_select %p272, %s25, 0
        %s274 = smul.addr %s271, 4
        %s275 = sadd.s32 %s273, %s274
        %s276 = smul.addr %s275, 8
        %s277 = scalar_lea.vmem %s3, %s276
        %p278 = scmp.lt.s32.totalorder %s24, 1
        %s279 = scalar_select %p278, %s24, 1
        %p280 = scmp.lt.s32.totalorder %s25, 0
        %s281 = scalar_select %p280, %s25, 0
        %s282 = sadd.s32 %s281, %s279
        %s283 = scalar_lea.vmem %s5, %s282
        %v284 = vld [vmem:[%s269] sm:$0xff]
        %v285 = vld [vmem:[%s269 + $0x8] sm:$0xff]
        %v286 = vld [vmem:[%s269 + $0x10] sm:$0xff]
        %v287 = vld [vmem:[%s269 + $0x18] sm:$0xff]
        %v288 = vld [vmem:[%s1] sm:$0xff]
        %v289 = vld [vmem:[%s1 + $0x8] sm:$0xff]
        %v290 = vld [vmem:[%s1 + $0x10] sm:$0xff]
        %v291 = vld [vmem:[%s1 + $0x18] sm:$0xff]
        %v292 = vld [vmem:[%s1 + $0x20] sm:$0xff]
        %v293 = vld [vmem:[%s1 + $0x28] sm:$0xff]
        %v294 = vld [vmem:[%s1 + $0x30] sm:$0xff]
        %v295 = vld [vmem:[%s1 + $0x38] sm:$0xff]
        %v296 = vld [vmem:[%s1 + $0x40] sm:$0xff]
        %v297 = vld [vmem:[%s1 + $0x48] sm:$0xff]
        %v298 = vld [vmem:[%s1 + $0x50] sm:$0xff]
        %v299 = vld [vmem:[%s1 + $0x58] sm:$0xff]
        %v300 = vld [vmem:[%s1 + $0x60] sm:$0xff]
        %v301 = vld [vmem:[%s1 + $0x68] sm:$0xff]
        %v302 = vld [vmem:[%s1 + $0x70] sm:$0xff]
        %v303 = vld [vmem:[%s1 + $0x78] sm:$0xff]
        %v304 = vld [vmem:[%s2] sm:$0xff]
        %v305 = vld [vmem:[%s2 + $0x8] sm:$0xff]
        %v306 = vld [vmem:[%s2 + $0x10] sm:$0xff]
        %v307 = vld [vmem:[%s2 + $0x18] sm:$0xff]
        %v308 = vld [vmem:[%s2 + $0x20] sm:$0xff]
        %v309 = vld [vmem:[%s2 + $0x28] sm:$0xff]
        %v310 = vld [vmem:[%s2 + $0x30] sm:$0xff]
        %v311 = vld [vmem:[%s2 + $0x38] sm:$0xff]
        %v312 = vld [vmem:[%s2 + $0x40] sm:$0xff]
        %v313 = vld [vmem:[%s2 + $0x48] sm:$0xff]
        %v314 = vld [vmem:[%s2 + $0x50] sm:$0xff]
        %v315 = vld [vmem:[%s2 + $0x58] sm:$0xff]
        %v316 = vld [vmem:[%s2 + $0x60] sm:$0xff]
        %v317 = vld [vmem:[%s2 + $0x68] sm:$0xff]
        %v318 = vld [vmem:[%s2 + $0x70] sm:$0xff]
        %v319 = vld [vmem:[%s2 + $0x78] sm:$0xff]
        %321 = vset.pattern.permute.xlu0 0
        %322 = vperm.xlu0 %321, %v304
        %v323 = vpop.permute.xlu0 %322
        %326 = vset.pattern.permute.xlu0 0
        %327 = vperm.xlu0 %326, %v305
        %v328 = vpop.permute.xlu0 %327
        %331 = vset.pattern.permute.xlu0 0
        %332 = vperm.xlu0 %331, %v306
        %v333 = vpop.permute.xlu0 %332
        %336 = vset.pattern.permute.xlu0 0
        %337 = vperm.xlu0 %336, %v307
        %v338 = vpop.permute.xlu0 %337
        %341 = vset.pattern.permute.xlu0 0
        %342 = vperm.xlu0 %341, %v308
        %v343 = vpop.permute.xlu0 %342
        %346 = vset.pattern.permute.xlu0 0
        %347 = vperm.xlu0 %346, %v309
        %v348 = vpop.permute.xlu0 %347
        %351 = vset.pattern.permute.xlu0 0
        %352 = vperm.xlu0 %351, %v310
        %v353 = vpop.permute.xlu0 %352
        %356 = vset.pattern.permute.xlu0 0
        %357 = vperm.xlu0 %356, %v311
        %v358 = vpop.permute.xlu0 %357
        %361 = vset.pattern.permute.xlu0 0
        %362 = vperm.xlu0 %361, %v312
        %v363 = vpop.permute.xlu0 %362
        %366 = vset.pattern.permute.xlu0 0
        %367 = vperm.xlu0 %366, %v313
        %v368 = vpop.permute.xlu0 %367
        %371 = vset.pattern.permute.xlu0 0
        %372 = vperm.xlu0 %371, %v314
        %v373 = vpop.permute.xlu0 %372
        %376 = vset.pattern.permute.xlu0 0
        %377 = vperm.xlu0 %376, %v315
        %v378 = vpop.permute.xlu0 %377
        %381 = vset.pattern.permute.xlu0 0
        %382 = vperm.xlu0 %381, %v316
        %v383 = vpop.permute.xlu0 %382
        %386 = vset.pattern.permute.xlu0 0
        %387 = vperm.xlu0 %386, %v317
        %v388 = vpop.permute.xlu0 %387
        %391 = vset.pattern.permute.xlu0 0
        %392 = vperm.xlu0 %391, %v318
        %v393 = vpop.permute.xlu0 %392
        %396 = vset.pattern.permute.xlu0 0
        %397 = vperm.xlu0 %396, %v319
        %v398 = vpop.permute.xlu0 %397
        %vm400 = vcmask 261120
        %v402 = vsel %vm400, %v288, 0
        %v405 = vsel %vm400, %v289, 0
        %v408 = vsel %vm400, %v290, 0
        %v411 = vsel %vm400, %v291, 0
        %v414 = vsel %vm400, %v292, 0
        %v417 = vsel %vm400, %v293, 0
        %v420 = vsel %vm400, %v294, 0
        %v423 = vsel %vm400, %v295, 0
        %v426 = vsel %vm400, %v296, 0
        %v429 = vsel %vm400, %v297, 0
        %v432 = vsel %vm400, %v298, 0
        %v435 = vsel %vm400, %v299, 0
        %v438 = vsel %vm400, %v300, 0
        %v441 = vsel %vm400, %v301, 0
        %v444 = vsel %vm400, %v302, 0
        %v447 = vsel %vm400, %v303, 0
        %449 = vmatprep.subr.mxu0 0.0
        %450 = vmatpush1.msra.mxu0 %v284
        %451 = vmatprep.subr.mxu0 0.0
        %452 = vmatpush1.msra.mxu0 %v285
        %453 = vmatprep.subr.mxu0 0.0
        %454 = vmatpush1.msra.mxu0 %v286
        %455 = vmatprep.subr.mxu0 0.0
        %456 = vmatpush1.msra.mxu0 %v287
        %457 = vmatprep.subr.mxu0 0.0
        %458 = vmatpush1.msra.mxu0 0.0
        %459 = vmatprep.subr.mxu0 0.0
        %460 = vmatpush1.msra.mxu0 0.0
        %461 = vmatprep.subr.mxu0 0.0
        %462 = vmatpush1.msra.mxu0 0.0
        %463 = vmatprep.subr.mxu0 0.0
        %464 = vmatpush1.msra.mxu0 0.0
        %465 = vmatprep.subr.mxu0 0.0
        %466 = vmatpush1.msra.mxu0 0.0
        %467 = vmatprep.subr.mxu0 0.0
        %468 = vmatpush1.msra.mxu0 0.0
        %469 = vmatprep.subr.mxu0 0.0
        %470 = vmatpush1.msra.mxu0 0.0
        %471 = vmatprep.subr.mxu0 0.0
        %472 = vmatpush1.msra.mxu0 0.0
        %473 = vmatprep.subr.mxu0 0.0
        %474 = vmatpush1.msra.mxu0 0.0
        %475 = vmatprep.subr.mxu0 0.0
        %476 = vmatpush1.msra.mxu0 0.0
        %477 = vmatprep.subr.mxu0 0.0
        %478 = vmatpush1.msra.mxu0 0.0
        %479 = vmatprep.subr.mxu0 0.0
        %480 = vmatpush1.msra.mxu0 0.0
        %481 = vmatprep.subr.mxu0 0.0
        %482 = vmatpush1.msra.mxu0 0.0
        %483 = vmatprep.subr.mxu0 0.0
        %484 = vmatpush1.msra.mxu0 0.0
        %485 = vmatprep.subr.mxu0 0.0
        %486 = vmatpush1.msra.mxu0 0.0
        %487 = vmatprep.subr.mxu0 0.0
        %488 = vmatpush1.msra.mxu0 0.0
        %489 = vmatprep.subr.mxu0 0.0
        %490 = vmatpush1.msra.mxu0 0.0
        %491 = vmatprep.subr.mxu0 0.0
        %492 = vmatpush1.msra.mxu0 0.0
        %493 = vmatprep.subr.mxu0 0.0
        %494 = vmatpush1.msra.mxu0 0.0
        %495 = vmatprep.subr.mxu0 0.0
        %496 = vmatpush1.msra.mxu0 0.0
        %497 = vmatprep.subr.mxu0 0.0
        %498 = vmatpush1.msra.mxu0 0.0
        %499 = vmatprep.subr.mxu0 0.0
        %500 = vmatpush1.msra.mxu0 0.0
        %501 = vmatprep.subr.mxu0 0.0
        %502 = vmatpush1.msra.mxu0 0.0
        %503 = vmatprep.subr.mxu0 0.0
        %504 = vmatpush1.msra.mxu0 0.0
        %505 = vmatprep.subr.mxu0 0.0
        %506 = vmatpush1.msra.mxu0 0.0
        %507 = vmatprep.subr.mxu0 0.0
        %508 = vmatpush1.msra.mxu0 0.0
        %509 = vmatprep.subr.mxu0 0.0
        %510 = vmatpush1.msra.mxu0 0.0
        %511 = vmatprep.subr.mxu0 0.0
        %512 = vmatpush1.msra.mxu0 0.0
        %513 = vmatprep.mubr.f32.mxu0 0.0
        %514 = vmatmul.mubr.f32.gmra.mrb[0].mxu0 %v402
        %v515 = vpop.f32.mrb[0].mxu0
        %v516 = vadd.f32 %v323, %v515
        %v517 = vpop.f32.mrb[0].mxu0
        %518 = vmatprep.mubr.f32.mxu0 0.0
        %519 = vmatmul.mubr.f32.gmra.mrb[0].mxu0 %v405
        %v520 = vpop.f32.mrb[0].mxu0
        %v521 = vadd.f32 %v328, %v520
        %v522 = vpop.f32.mrb[0].mxu0
        %523 = vmatprep.mubr.f32.mxu0 0.0
        %524 = vmatmul.mubr.f32.gmra.mrb[0].mxu0 %v408
        %v525 = vpop.f32.mrb[0].mxu0
        %v526 = vadd.f32 %v333, %v525
        %v527 = vpop.f32.mrb[0].mxu0
        %528 = vmatprep.mubr.f32.mxu0 0.0
        %529 = vmatmul.mubr.f32.gmra.mrb[0].mxu0 %v411
        %v530 = vpop.f32.mrb[0].mxu0
        %v531 = vadd.f32 %v338, %v530
        %v532 = vpop.f32.mrb[0].mxu0
        %533 = vmatprep.mubr.f32.mxu0 0.0
        %534 = vmatmul.mubr.f32.gmra.mrb[0].mxu0 %v414
        %v535 = vpop.f32.mrb[0].mxu0
        %v536 = vadd.f32 %v343, %v535
        %v537 = vpop.f32.mrb[0].mxu0
        %538 = vmatprep.mubr.f32.mxu0 0.0
        %539 = vmatmul.mubr.f32.gmra.mrb[0].mxu0 %v417
        %v540 = vpop.f32.mrb[0].mxu0
        %v541 = vadd.f32 %v348, %v540
        %v542 = vpop.f32.mrb[0].mxu0
        %543 = vmatprep.mubr.f32.mxu0 0.0
        %544 = vmatmul.mubr.f32.gmra.mrb[0].mxu0 %v420
        %v545 = vpop.f32.mrb[0].mxu0
        %v546 = vadd.f32 %v353, %v545
        %v547 = vpop.f32.mrb[0].mxu0
        %548 = vmatprep.mubr.f32.mxu0 0.0
        %549 = vmatmul.mubr.f32.gmra.mrb[0].mxu0 %v423
        %v550 = vpop.f32.mrb[0].mxu0
        %v551 = vadd.f32 %v358, %v550
        %v552 = vpop.f32.mrb[0].mxu0
        %553 = vmatprep.mubr.f32.mxu0 0.0
        %554 = vmatmul.mubr.f32.gmra.mrb[0].mxu0 %v426
        %v555 = vpop.f32.mrb[0].mxu0
        %v556 = vadd.f32 %v363, %v555
        %v557 = vpop.f32.mrb[0].mxu0
        %558 = vmatprep.mubr.f32.mxu0 0.0
        %559 = vmatmul.mubr.f32.gmra.mrb[0].mxu0 %v429
        %v560 = vpop.f32.mrb[0].mxu0
        %v561 = vadd.f32 %v368, %v560
        %v562 = vpop.f32.mrb[0].mxu0
        %563 = vmatprep.mubr.f32.mxu0 0.0
        %564 = vmatmul.mubr.f32.gmra.mrb[0].mxu0 %v432
        %v565 = vpop.f32.mrb[0].mxu0
        %v566 = vadd.f32 %v373, %v565
        %v567 = vpop.f32.mrb[0].mxu0
        %568 = vmatprep.mubr.f32.mxu0 0.0
        %569 = vmatmul.mubr.f32.gmra.mrb[0].mxu0 %v435
        %v570 = vpop.f32.mrb[0].mxu0
        %v571 = vadd.f32 %v378, %v570
        %v572 = vpop.f32.mrb[0].mxu0
        %573 = vmatprep.mubr.f32.mxu0 0.0
        %574 = vmatmul.mubr.f32.gmra.mrb[0].mxu0 %v438
        %v575 = vpop.f32.mrb[0].mxu0
        %v576 = vadd.f32 %v383, %v575
        %v577 = vpop.f32.mrb[0].mxu0
        %578 = vmatprep.mubr.f32.mxu0 0.0
        %579 = vmatmul.mubr.f32.gmra.mrb[0].mxu0 %v441
        %v580 = vpop.f32.mrb[0].mxu0
        %v581 = vadd.f32 %v388, %v580
        %v582 = vpop.f32.mrb[0].mxu0
        %583 = vmatprep.mubr.f32.mxu0 0.0
        %584 = vmatmul.mubr.f32.gmra.mrb[0].mxu0 %v444
        %v585 = vpop.f32.mrb[0].mxu0
        %v586 = vadd.f32 %v393, %v585
        %v587 = vpop.f32.mrb[0].mxu0
        %588 = vmatprep.mubr.f32.mxu0 0.0
        %589 = vmatmul.mubr.f32.gmra.mrb[0].mxu0 %v447
        %v590 = vpop.f32.mrb[0].mxu0
        %v591 = vadd.f32 %v398, %v590
        %v592 = vpop.f32.mrb[0].mxu0
        %593 = vdwg.mxu0
        %v594 = vlaneseq
        %v595 = vshrl.u32 %v594, 7
        %v596 = vadd.s32 %v595, 8
        %v597 = vadd.s32 %v595, 16
        %v598 = vadd.s32 %v595, 24
        %v599 = vadd.s32 %v595, 32
        %v600 = vadd.s32 %v595, 40
        %v601 = vadd.s32 %v595, 48
        %v602 = vadd.s32 %v595, 56
        %v603 = vadd.s32 %v595, 64
        %v604 = vadd.s32 %v595, 72
        %v605 = vadd.s32 %v595, 80
        %v606 = vadd.s32 %v595, 88
        %v607 = vadd.s32 %v595, 96
        %v608 = vadd.s32 %v595, 104
        %v609 = vadd.s32 %v595, 112
        %v610 = vadd.s32 %v595, 120
        %v611 = vmin.f32 %v516, %v536
        %v612 = vmin.f32 %v521, %v541
        %v613 = vmin.f32 %v526, %v546
        %v614 = vmin.f32 %v531, %v551
        %v615 = vmin.f32 %v611, %v556
        %v616 = vmin.f32 %v612, %v561
        %v617 = vmin.f32 %v613, %v566
        %v618 = vmin.f32 %v614, %v571
        %v619 = vmin.f32 %v615, %v576
        %v620 = vmin.f32 %v616, %v581
        %v621 = vmin.f32 %v617, %v586
        %v622 = vmin.f32 %v618, %v591
        %v623 = vmin.f32 %v619, %v620
        %v624 = vmin.f32 %v621, %v622
        %v625 = vmin.f32 %v623, %v624
        %v626 = vrot.slane %v625, 4
        %v627 = vmin.f32 %v625, %v626
        %v628 = vrot.slane %v627, 2
        %v629 = vmin.f32 %v627, %v628
        %v630 = vrot.slane %v629, 1
        %v631 = vmin.f32 %v629, %v630
        %vm632 = vcmp.eq.f32.partialorder %v516, %v631
        %vm633 = vcmp.eq.f32.partialorder %v521, %v631
        %vm634 = vcmp.eq.f32.partialorder %v526, %v631
        %vm635 = vcmp.eq.f32.partialorder %v531, %v631
        %vm636 = vcmp.eq.f32.partialorder %v536, %v631
        %vm637 = vcmp.eq.f32.partialorder %v541, %v631
        %vm638 = vcmp.eq.f32.partialorder %v546, %v631
        %vm639 = vcmp.eq.f32.partialorder %v551, %v631
        %vm640 = vcmp.eq.f32.partialorder %v556, %v631
        %vm641 = vcmp.eq.f32.partialorder %v561, %v631
        %vm642 = vcmp.eq.f32.partialorder %v566, %v631
        %vm643 = vcmp.eq.f32.partialorder %v571, %v631
        %vm644 = vcmp.eq.f32.partialorder %v576, %v631
        %vm645 = vcmp.eq.f32.partialorder %v581, %v631
        %vm646 = vcmp.eq.f32.partialorder %v586, %v631
        %vm647 = vcmp.eq.f32.partialorder %v591, %v631
        %v648 = vsel %vm632, %v595, 128
        %v649 = vsel %vm633, %v596, 128
        %v650 = vsel %vm634, %v597, 128
        %v651 = vsel %vm635, %v598, 128
        %v652 = vsel %vm636, %v599, 128
        %v653 = vsel %vm637, %v600, 128
        %v654 = vsel %vm638, %v601, 128
        %v655 = vsel %vm639, %v602, 128
        %v656 = vsel %vm640, %v603, 128
        %v657 = vsel %vm641, %v604, 128
        %v658 = vsel %vm642, %v605, 128
        %v659 = vsel %vm643, %v606, 128
        %v660 = vsel %vm644, %v607, 128
        %v661 = vsel %vm645, %v608, 128
        %v662 = vsel %vm646, %v609, 128
        %v663 = vsel %vm647, %v610, 128
        %vm664 = vcmp.lt.s32.totalorder %v648, %v652
        %v665 = vsel %vm664, %v648, %v652
        %vm666 = vcmp.lt.s32.totalorder %v649, %v653
        %v667 = vsel %vm666, %v649, %v653
        %vm668 = vcmp.lt.s32.totalorder %v650, %v654
        %v669 = vsel %vm668, %v650, %v654
        %vm670 = vcmp.lt.s32.totalorder %v651, %v655
        %v671 = vsel %vm670, %v651, %v655
        %vm672 = vcmp.lt.s32.totalorder %v665, %v656
        %v673 = vsel %vm672, %v665, %v656
        %vm674 = vcmp.lt.s32.totalorder %v667, %v657
        %v675 = vsel %vm674, %v667, %v657
        %vm676 = vcmp.lt.s32.totalorder %v669, %v658
        %v677 = vsel %vm676, %v669, %v658
        %vm678 = vcmp.lt.s32.totalorder %v671, %v659
        %v679 = vsel %vm678, %v671, %v659
        %vm680 = vcmp.lt.s32.totalorder %v673, %v660
        %v681 = vsel %vm680, %v673, %v660
        %vm682 = vcmp.lt.s32.totalorder %v675, %v661
        %v683 = vsel %vm682, %v675, %v661
        %vm684 = vcmp.lt.s32.totalorder %v677, %v662
        %v685 = vsel %vm684, %v677, %v662
        %vm686 = vcmp.lt.s32.totalorder %v679, %v663
        %v687 = vsel %vm686, %v679, %v663
        %vm688 = vcmp.lt.s32.totalorder %v681, %v683
        %v689 = vsel %vm688, %v681, %v683
        %vm690 = vcmp.lt.s32.totalorder %v685, %v687
        %v691 = vsel %vm690, %v685, %v687
        %vm692 = vcmp.lt.s32.totalorder %v689, %v691
        %v693 = vsel %vm692, %v689, %v691
        %v694 = vrot.slane %v693, 4
        %vm695 = vcmp.lt.s32.totalorder %v693, %v694
        %v696 = vsel %vm695, %v693, %v694
        %v697 = vrot.slane %v696, 2
        %vm698 = vcmp.lt.s32.totalorder %v696, %v697
        %v699 = vsel %vm698, %v696, %v697
        %v700 = vrot.slane %v699, 1
        %vm701 = vcmp.lt.s32.totalorder %v699, %v700
        %v702 = vsel %vm701, %v699, %v700
        %703 = vst [vmem:[%s253] sm:$0x1] %v702
        %v704 = vmul.f32 %v284, %v284
        %v705 = vmul.f32 %v285, %v285
        %v706 = vmul.f32 %v286, %v286
        %v707 = vmul.f32 %v287, %v287
        %v708 = vadd.f32 %v704, %v705
        %v709 = vadd.f32 %v708, %v706
        %v710 = vadd.f32 %v709, %v707
        %v711 = vrot.slane %v710, 4
        %v712 = vadd.f32 %v710, %v711
        %v713 = vrot.slane %v712, 2
        %v714 = vadd.f32 %v712, %v713
        %v715 = vrot.slane %v714, 1
        %v716 = vadd.f32 %v714, %v715
        %v717 = vadd.f32 %v631, %v716
        %vm718 = vcmask 1040384
        %v719 = vsel %vm718, %v717, 0.0
        %720 = vadd.xlane.f32.xlu0 %v719
        %v721 = vpop.xlane.xlu0 %720
        %v722 = vrot.slane %v721, 4
        %v723 = vadd.f32 %v721, %v722
        %v724 = vrot.slane %v723, 2
        %v725 = vadd.f32 %v723, %v724
        %v726 = vrot.slane %v725, 1
        %v727 = vadd.f32 %v725, %v726
        %s728 = vtos %v727
        %v729 = vstv %s728
        %vm730 = vcmask 0
        %731 = vst.msk [vmem:[%s283] sm:$0x1] %vm730, %v729
        %vm732 = vcmp.eq.s32.totalorder %v595, %v702
        %vm733 = vcmp.eq.s32.totalorder %v596, %v702
        %vm734 = vcmp.eq.s32.totalorder %v597, %v702
        %vm735 = vcmp.eq.s32.totalorder %v598, %v702
        %vm736 = vcmp.eq.s32.totalorder %v599, %v702
        %vm737 = vcmp.eq.s32.totalorder %v600, %v702
        %vm738 = vcmp.eq.s32.totalorder %v601, %v702
        %vm739 = vcmp.eq.s32.totalorder %v602, %v702
        %vm740 = vcmp.eq.s32.totalorder %v603, %v702
        %vm741 = vcmp.eq.s32.totalorder %v604, %v702
        %vm742 = vcmp.eq.s32.totalorder %v605, %v702
        %vm743 = vcmp.eq.s32.totalorder %v606, %v702
        %vm744 = vcmp.eq.s32.totalorder %v607, %v702
        %vm745 = vcmp.eq.s32.totalorder %v608, %v702
        %vm746 = vcmp.eq.s32.totalorder %v609, %v702
        %vm747 = vcmp.eq.s32.totalorder %v610, %v702
        %v748 = vsel %vm732, 1, 0
        %v749 = vsel %vm733, 1, 0
        %v750 = vsel %vm734, 1, 0
        %v751 = vsel %vm735, 1, 0
        %v752 = vsel %vm736, 1, 0
        %v753 = vsel %vm737, 1, 0
        %v754 = vsel %vm738, 1, 0
        %v755 = vsel %vm739, 1, 0
        %v756 = vsel %vm740, 1, 0
        %v757 = vsel %vm741, 1, 0
        %v758 = vsel %vm742, 1, 0
        %v759 = vsel %vm743, 1, 0
        %v760 = vsel %vm744, 1, 0
        %v761 = vsel %vm745, 1, 0
        %v762 = vsel %vm746, 1, 0
        %v763 = vsel %vm747, 1, 0
        %v764 = vcvt.s32.f32 %v748
        %v765 = vcvt.s32.f32 %v749
        %v766 = vcvt.s32.f32 %v750
        %v767 = vcvt.s32.f32 %v751
        %v768 = vcvt.s32.f32 %v752
        %v769 = vcvt.s32.f32 %v753
        %v770 = vcvt.s32.f32 %v754
        %v771 = vcvt.s32.f32 %v755
        %v772 = vcvt.s32.f32 %v756
        %v773 = vcvt.s32.f32 %v757
        %v774 = vcvt.s32.f32 %v758
        %v775 = vcvt.s32.f32 %v759
        %v776 = vcvt.s32.f32 %v760
        %v777 = vcvt.s32.f32 %v761
        %v778 = vcvt.s32.f32 %v762
        %v779 = vcvt.s32.f32 %v763
        %780 = vxpose.xlu0.b32.start [1/16] %v288, 128
        %781 = vxpose.xlu0.b32.cont [2/16] %v289, 128
        %782 = vxpose.xlu0.b32.cont [3/16] %v290, 128
        %783 = vxpose.xlu0.b32.cont [4/16] %v291, 128
        %784 = vxpose.xlu0.b32.cont [5/16] %v292, 128
        %785 = vxpose.xlu0.b32.cont [6/16] %v293, 128
        %786 = vxpose.xlu0.b32.cont [7/16] %v294, 128
        %787 = vxpose.xlu0.b32.cont [8/16] %v295, 128
        %788 = vxpose.xlu0.b32.cont [9/16] %v296, 128
        %789 = vxpose.xlu0.b32.cont [10/16] %v297, 128
        %790 = vxpose.xlu0.b32.cont [11/16] %v298, 128
        %791 = vxpose.xlu0.b32.cont [12/16] %v299, 128
        %792 = vxpose.xlu0.b32.cont [13/16] %v300, 128
        %793 = vxpose.xlu0.b32.cont [14/16] %v301, 128
        %794 = vxpose.xlu0.b32.cont [15/16] %v302, 128
        %795 = vxpose.xlu0.b32.end [16/16] %v303, 128
        %v796 = vpop.trf.xlu0
        %v797 = vpop.trf.xlu0
        %v798 = vpop.trf.xlu0
        %v799 = vpop.trf.xlu0
        %v800 = vpop.trf.xlu0
        %v801 = vpop.trf.xlu0
        %v802 = vpop.trf.xlu0
        %v803 = vpop.trf.xlu0
        %v804 = vpop.trf.xlu0
        %v805 = vpop.trf.xlu0
        %v806 = vpop.trf.xlu0
        %v807 = vpop.trf.xlu0
        %v808 = vpop.trf.xlu0
        %v809 = vpop.trf.xlu0
        %v810 = vpop.trf.xlu0
        %v811 = vpop.trf.xlu0
        %812 = vmatprep.subr.mxu0 0.0
        %813 = vmatpush1.msra.mxu0 %v764
        %814 = vmatprep.subr.mxu0 0.0
        %815 = vmatpush1.msra.mxu0 %v765
        %816 = vmatprep.subr.mxu0 0.0
        %817 = vmatpush1.msra.mxu0 %v766
        %818 = vmatprep.subr.mxu0 0.0
        %819 = vmatpush1.msra.mxu0 %v767
        %820 = vmatprep.subr.mxu0 0.0
        %821 = vmatpush1.msra.mxu0 %v768
        %822 = vmatprep.subr.mxu0 0.0
        %823 = vmatpush1.msra.mxu0 %v769
        %824 = vmatprep.subr.mxu0 0.0
        %825 = vmatpush1.msra.mxu0 %v770
        %826 = vmatprep.subr.mxu0 0.0
        %827 = vmatpush1.msra.mxu0 %v771
        %828 = vmatprep.subr.mxu0 0.0
        %829 = vmatpush1.msra.mxu0 %v772
        %830 = vmatprep.subr.mxu0 0.0
        %831 = vmatpush1.msra.mxu0 %v773
        %832 = vmatprep.subr.mxu0 0.0
        %833 = vmatpush1.msra.mxu0 %v774
        %834 = vmatprep.subr.mxu0 0.0
        %835 = vmatpush1.msra.mxu0 %v775
        %836 = vmatprep.subr.mxu0 0.0
        %837 = vmatpush1.msra.mxu0 %v776
        %838 = vmatprep.subr.mxu0 0.0
        %839 = vmatpush1.msra.mxu0 %v777
        %840 = vmatprep.subr.mxu0 0.0
        %841 = vmatpush1.msra.mxu0 %v778
        %842 = vmatprep.subr.mxu0 0.0
        %843 = vmatpush1.msra.mxu0 %v779
        %844 = vmatprep.subr.mxu0 0.0
        %845 = vmatpush1.msra.mxu0 0.0
        %846 = vmatprep.subr.mxu0 0.0
        %847 = vmatpush1.msra.mxu0 0.0
        %848 = vmatprep.subr.mxu0 0.0
        %849 = vmatpush1.msra.mxu0 0.0
        %850 = vmatprep.subr.mxu0 0.0
        %851 = vmatpush1.msra.mxu0 0.0
        %852 = vmatprep.subr.mxu0 0.0
        %853 = vmatpush1.msra.mxu0 0.0
        %854 = vmatprep.subr.mxu0 0.0
        %855 = vmatpush1.msra.mxu0 0.0
        %856 = vmatprep.subr.mxu0 0.0
        %857 = vmatpush1.msra.mxu0 0.0
        %858 = vmatprep.subr.mxu0 0.0
        %859 = vmatpush1.msra.mxu0 0.0
        %860 = vmatprep.subr.mxu0 0.0
        %861 = vmatpush1.msra.mxu0 0.0
        %862 = vmatprep.subr.mxu0 0.0
        %863 = vmatpush1.msra.mxu0 0.0
        %864 = vmatprep.subr.mxu0 0.0
        %865 = vmatpush1.msra.mxu0 0.0
        %866 = vmatprep.subr.mxu0 0.0
        %867 = vmatpush1.msra.mxu0 0.0
        %868 = vmatprep.subr.mxu0 0.0
        %869 = vmatpush1.msra.mxu0 0.0
        %870 = vmatprep.subr.mxu0 0.0
        %871 = vmatpush1.msra.mxu0 0.0
        %872 = vmatprep.subr.mxu0 0.0
        %873 = vmatpush1.msra.mxu0 0.0
        %874 = vmatprep.subr.mxu0 0.0
        %875 = vmatpush1.msra.mxu0 0.0
        %876 = vmatprep.mubr.f32.mxu0 0.0
        %877 = vmatmul.mubr.f32.gmra.mrb[0].mxu0 %v796
        %v878 = vpop.f32.mrb[0].mxu0
        %v879 = vadd.f32 0.0, %v878
        %v880 = vpop.f32.mrb[0].mxu0
        %881 = vmatprep.mubr.f32.mxu0 0.0
        %882 = vmatmul.mubr.f32.gmra.mrb[0].mxu0 %v797
        %v883 = vpop.f32.mrb[0].mxu0
        %v884 = vadd.f32 0.0, %v883
        %v885 = vpop.f32.mrb[0].mxu0
        %886 = vmatprep.mubr.f32.mxu0 0.0
        %887 = vmatmul.mubr.f32.gmra.mrb[0].mxu0 %v798
        %v888 = vpop.f32.mrb[0].mxu0
        %v889 = vadd.f32 0.0, %v888
        %v890 = vpop.f32.mrb[0].mxu0
        %891 = vmatprep.mubr.f32.mxu0 0.0
        %892 = vmatmul.mubr.f32.gmra.mrb[0].mxu0 %v799
        %v893 = vpop.f32.mrb[0].mxu0
        %v894 = vadd.f32 0.0, %v893
        %v895 = vpop.f32.mrb[0].mxu0
        %896 = vdwg.mxu0
        %v897 = vmul.f32 %v879, -0.5
        %v898 = vmul.f32 %v884, -0.5
        %v899 = vmul.f32 %v889, -0.5
        %v900 = vmul.f32 %v894, -0.5
        %901 = vst [vmem:[%s277] sm:$0xff] %v897
        %902 = vst [vmem:[%s277 + $0x8] sm:$0xff] %v898
        %903 = vst [vmem:[%s277 + $0x10] sm:$0xff] %v899
        %904 = vst [vmem:[%s277 + $0x18] sm:$0xff] %v900
        %p905 = scmp.lt.s32.totalorder %s24, 1
        %s906 = scalar_select %p905, %s24, 1
        %p907 = scmp.lt.s32.totalorder %s25, 0
        %s908 = scalar_select %p907, %s25, 0
        %s909 = smul.addr %s906, 4
        %s910 = sadd.s32 %s908, %s909
        %s911 = smul.addr %s910, 8
        %s912 = scalar_lea.vmem %s3, %s911
        %s913 = sand.u32 %s140, 1
        %s914 = scalar_lea.sflag [#allocation3], %s913
        %s915 = sand.u32 %s140, 1
        %s916 = scalar_lea.vmem [#allocation2], %s915
        %p917 = scmp.lt.s32.totalorder %s24, 1
        %s918 = scalar_select %p917, %s24, 1
        %p919 = scmp.lt.s32.totalorder %s25, 0
        %s920 = scalar_select %p919, %s25, 0
        %s921 = sadd.s32 %s920, %s918
        %s922 = scalar_lea.vmem %s5, %s921
        // Predicated region
        $region33: #{vector_quantizer_v2_forward.1} parent=31 // pred_check
          %p923 = pneg %p122
        $region34: #{vector_quantizer_v2_forward.1} parent=31 // pred_check_branch
          %925 = sbr.rel (%p923) target = $region36
        $region35: #{vector_quantizer_v2_forward.1} parent=31 // pred_region
          _
        $region36: #{vector_quantizer_v2_forward.1} parent=31 // pred_fallthru
          _
        // Predicated region
        $region37: #{vector_quantizer_v2_forward.1} parent=31 // pred_check
          %p926 = pneg %p150
        $region38: #{vector_quantizer_v2_forward.1} parent=31 // pred_check_branch
          %928 = sbr.rel (%p926) target = $region40
        $region39: #{vector_quantizer_v2_forward.1} parent=31 // pred_region
          %s930 = ssub.s32 16, 16
          %931 = vsyncadd %s914, %s930
          %s932 = sadd.s32 %s25, %s24
          %s933 = smul.addr %s932, 16
          %s934 = scalar_lea.hbm %s4, %s933
          %s936 = sshll.u32 %s916, 4
          %s937 = int_to_ptr.vmem [resolvable:$true] %s936
          %939 = dma.vmem_to_hbm [thread:$0]  %s937, 16, %s934, %s914
        $region40: #{vector_quantizer_v2_forward.1} parent=31 // pred_fallthru
          _
        // Predicated region
        $region41: #{vector_quantizer_v2_forward.1} parent=31 // pred_check
          %p940 = pneg %p178
        $region42: #{vector_quantizer_v2_forward.1} parent=31 // pred_check_branch
          %942 = sbr.rel (%p940) target = $region44
        $region43: #{vector_quantizer_v2_forward.1} parent=31 // pred_region
          _
        $region44: #{vector_quantizer_v2_forward.1} parent=31 // pred_fallthru
          _
      $region32: #{vector_quantizer_v2_forward.1} parent=5 // pred_fallthru
        _
      %p943 = scmp.le.s32.totalorder 2, %s15
      // Predicated region
      $region45: #{vector_quantizer_v2_forward.1} parent=5 // pred_check
        %p944 = pneg %p943
      $region46: #{vector_quantizer_v2_forward.1} parent=5 // pred_check_branch
        %946 = sbr.rel (%p944) target = $region48
      $region47: #{vector_quantizer_v2_forward.1} parent=5 // pred_region
        %s947 = ssub.s32 %s15, 2
        // Predicated region
        $region49: #{vector_quantizer_v2_forward.1} parent=47 // pred_check
          %p948 = pneg %p128
        $region50: #{vector_quantizer_v2_forward.1} parent=47 // pred_check_branch
          %950 = sbr.rel (%p948) target = $region52
        $region51: #{vector_quantizer_v2_forward.1} parent=47 // pred_region
          %p951 = scmp.lt.s32.totalorder %s26, 1
          %s952 = scalar_select %p951, %s26, 1
          %p953 = scmp.lt.s32.totalorder %s27, 0
          %s954 = scalar_select %p953, %s27, 0
          %s955 = smul.addr %s952, 4
          %s956 = sadd.s32 %s954, %s955
          %s957 = smul.addr %s956, 8
          %s958 = scalar_lea.vmem %s3, %s957
        $region52: #{vector_quantizer_v2_forward.1} parent=47 // pred_fallthru
          _
        // Predicated region
        $region53: #{vector_quantizer_v2_forward.1} parent=47 // pred_check
          %p959 = pneg %p156
        $region54: #{vector_quantizer_v2_forward.1} parent=47 // pred_check_branch
          %961 = sbr.rel (%p959) target = $region56
        $region55: #{vector_quantizer_v2_forward.1} parent=47 // pred_region
          %s962 = sand.u32 %s141, 1
          %s963 = scalar_lea.sflag [#allocation3], %s962
          %s964 = sand.u32 %s141, 1
          %s965 = scalar_lea.vmem [#allocation2], %s964
          %966 = dma.done %s963, 16
        $region56: #{vector_quantizer_v2_forward.1} parent=47 // pred_fallthru
          _
        // Predicated region
        $region57: #{vector_quantizer_v2_forward.1} parent=47 // pred_check
          %p967 = pneg %p184
        $region58: #{vector_quantizer_v2_forward.1} parent=47 // pred_check_branch
          %969 = sbr.rel (%p967) target = $region60
        $region59: #{vector_quantizer_v2_forward.1} parent=47 // pred_region
          %p970 = scmp.lt.s32.totalorder %s26, 1
          %s971 = scalar_select %p970, %s26, 1
          %p972 = scmp.lt.s32.totalorder %s27, 0
          %s973 = scalar_select %p972, %s27, 0
          %s974 = sadd.s32 %s973, %s971
          %s975 = scalar_lea.vmem %s5, %s974
        $region60: #{vector_quantizer_v2_forward.1} parent=47 // pred_fallthru
          _
      $region48: #{vector_quantizer_v2_forward.1} parent=5 // pred_fallthru
        _
    $region6: #{vector_quantizer_v2_forward.1} parent=1 // loop_footer
      %s19 = sadd.s32 1, %s15
    $region7: #{vector_quantizer_v2_forward.1} parent=1 // loop_footer_branch
      %14 = sbr.rel target = $region3
    $region8: #{vector_quantizer_v2_forward.1} parent=1 // loop_exit
      _
    %976 = vsyncpa [#allocation3], 1
    %s977 = scalar_lea.sflag [#allocation3], 1
    %978 = vsyncpa %s977, 1

</llo_original>
